<compile_context>
chip_gen: v7x
topology: tpu7x:2x2x1
jax: 0.10.0
libtpu: 0.0.40
codegen_flags: <defaults>
</compile_context>

<pallas_src>
import jax
import jax.numpy as jnp
from jax.experimental import pallas as pl
from jax.experimental.pallas import tpu as pltpu

STATE_DIM = 2
HIDDEN = 128
ACTION_DIM = 1

_MAX_TM = 2048  # rows (batch elements) per grid step, multiple of 128


def _round_up(n: int, m: int) -> int:
    return ((n + m - 1) // m) * m


def mlp_kernel(xT_ref, w1T_ref, b1T_ref, w2T_ref, b2T_ref, w3T_ref, o_ref):
    # xT_ref : (STATE_DIM, TM) bf16   -- batch on the lane axis
    # w1T_ref: (HIDDEN, STATE_DIM) bf16
    # b1T_ref: (HIDDEN, 1) bf16
    # w2T_ref: (HIDDEN, HIDDEN) bf16
    # b2T_ref: (HIDDEN, 1) bf16
    # w3T_ref: (1, HIDDEN) bf16
    # o_ref  : (1, TM) f32            -- lane-dense output store

    # --- Layer 1: Linear(2 -> 128) on the MXU (K=2, padded by Mosaic), f32 acc.
    h1 = jnp.dot(w1T_ref[...], xT_ref[...],
                 preferred_element_type=jnp.float32)          # (HIDDEN, TM) f32
    h1 = jnp.maximum(h1.astype(jnp.bfloat16) + b1T_ref[...], 0)  # bf16 bias+ReLU

    # --- Layer 2: Linear(128 -> 128), the only big GEMM: bf16 MXU, f32 acc.
    h2 = jnp.dot(w2T_ref[...], h1,
                 preferred_element_type=jnp.float32)          # (HIDDEN, TM) f32
    h2 = jnp.maximum(h2.astype(jnp.bfloat16) + b2T_ref[...], 0)  # bf16 bias+ReLU

    # --- Layer 3: Linear(128 -> 1): (1,HIDDEN) @ (HIDDEN,TM) -> (1,TM).
    out = jnp.dot(w3T_ref[...], h2,
                  preferred_element_type=jnp.float32)         # (1, TM) f32
    o_ref[...] = out                                          # bias b3 added in wrapper


def _select_tiling(B: int):
    """Pick (tm, num_blocks): tm multiple of 128, >=2 blocks when B > 128
    (so v7x's two TensorCores both get work), block padding stays small."""
    b128 = _round_up(B, 128)
    if b128 <= 128:
        return 128, 1
    nb = max(2, pl.cdiv(b128, _MAX_TM))
    tm = min(_MAX_TM, _round_up(pl.cdiv(B, nb), 128))
    nb = pl.cdiv(b128, tm)
    return tm, nb


def cross_entropy_agent_forward(x, params):
    """x: (B, STATE_DIM) float32. params: dict of w1,b1,w2,b2,w3,b3 ((in,out) weights)."""
    B = x.shape[0]
    tm, num_blocks = _select_tiling(B)
    b_pad = num_blocks * tm

    # Batch-on-lanes layout + one-time bf16 casts / transposes (done outside the kernel).
    xT = x.T.astype(jnp.bfloat16)                                   # (STATE_DIM, B)
    if b_pad != B:
        xT = jnp.pad(xT, ((0, 0), (0, b_pad - B)))
    w1T = params["w1"].T.astype(jnp.bfloat16)                       # (HIDDEN, STATE_DIM)
    b1T = params["b1"].reshape(HIDDEN, 1).astype(jnp.bfloat16)      # (HIDDEN, 1)
    w2T = params["w2"].T.astype(jnp.bfloat16)                       # (HIDDEN, HIDDEN)
    b2T = params["b2"].reshape(HIDDEN, 1).astype(jnp.bfloat16)      # (HIDDEN, 1)
    w3T = params["w3"].reshape(1, HIDDEN).astype(jnp.bfloat16)      # (1, HIDDEN)

    const = lambda shape: pl.BlockSpec(shape, lambda i: (0,) * len(shape))

    out = pl.pallas_call(
        mlp_kernel,
        out_shape=jax.ShapeDtypeStruct((1, b_pad), jnp.float32),
        grid=(num_blocks,),
        in_specs=[
            pl.BlockSpec((STATE_DIM, tm), lambda i: (0, i)),  # xᵀ tile (pipelined)
            const(w1T.shape),                                  # weights/biases resident
            const(b1T.shape),
            const(w2T.shape),
            const(b2T.shape),
            const(w3T.shape),
        ],
        out_specs=pl.BlockSpec((1, tm), lambda i: (0, i)),     # lane-dense store
        compiler_params=pltpu.CompilerParams(
            dimension_semantics=("parallel",),  # v7x: shard batch tiles across 2 TCs
            vmem_limit_bytes=32 << 20,
        ),
    )(xT, w1T, b1T, w2T, b2T, w3T)

    # Slice off padding, restore (B, 1), and fold in the scalar output bias b3.
    return out[0, :B].reshape(B, ACTION_DIM) + params["b3"]


def init_params(key):
    """Deterministic init mimicking PyTorch nn.Linear default
    (uniform(-1/sqrt(fan_in), 1/sqrt(fan_in)))."""
    ks = jax.random.split(key, 6)

    def linear(kw, kb, fan_in, fan_out):
        bound = 1.0 / jnp.sqrt(float(fan_in))
        w = jax.random.uniform(kw, (fan_in, fan_out), jnp.float32, -bound, bound)
        b = jax.random.uniform(kb, (1, fan_out), jnp.float32, -bound, bound)
        return w, b

    w1, b1 = linear(ks[0], ks[1], STATE_DIM, HIDDEN)
    w2, b2 = linear(ks[2], ks[3], HIDDEN, HIDDEN)
    w3, b3 = linear(ks[4], ks[5], HIDDEN, ACTION_DIM)
    return {"w1": w1, "b1": b1, "w2": w2, "b2": b2, "w3": w3, "b3": b3}


def reference_forward_f32(x, p):
    """Pure-f32 reference: exact PyTorch forward semantics (x @ W + b layout)."""
    h1 = jnp.maximum(x @ p["w1"] + p["b1"], 0.0)
    h2 = jnp.maximum(h1 @ p["w2"] + p["b2"], 0.0)
    return h2 @ p["w3"] + p["b3"]


def reference_forward_mirrored(x, p):
    """Reference mirroring the kernel numerics exactly (bf16 operands + bf16
    bias/ReLU path, f32 MXU accumulation, transposed layout)."""
    xT = x.T.astype(jnp.bfloat16)
    w1T = p["w1"].T.astype(jnp.bfloat16)
    b1T = p["b1"].reshape(HIDDEN, 1).astype(jnp.bfloat16)
    w2T = p["w2"].T.astype(jnp.bfloat16)
    b2T = p["b2"].reshape(HIDDEN, 1).astype(jnp.bfloat16)
    w3T = p["w3"].reshape(1, HIDDEN).astype(jnp.bfloat16)

    h1 = jnp.dot(w1T, xT, preferred_element_type=jnp.float32)
    h1 = jnp.maximum(h1.astype(jnp.bfloat16) + b1T, 0)
    h2 = jnp.dot(w2T, h1, preferred_element_type=jnp.float32)
    h2 = jnp.maximum(h2.astype(jnp.bfloat16) + b2T, 0)
    out = jnp.dot(w3T, h2, preferred_element_type=jnp.float32)   # (1, B)
    return out.T + p["b3"]


if __name__ == "__main__":
    key = jax.random.PRNGKey(0)
    k_params, k_x = jax.random.split(key)

    params = init_params(k_params)
    # Batch of MountainCarContinuous states: (batch=8, state_dim=2)
    x = jax.random.normal(k_x, (8, STATE_DIM), jnp.float32)

    out = cross_entropy_agent_forward(x, params)
    out = jax.block_until_ready(out)

    assert out.shape == (8, ACTION_DIM)
    ref_mirror = reference_forward_mirrored(x, params)   # same bf16/transposed math
    ref_f32 = reference_forward_f32(x, params)           # PyTorch-equivalent f32
    assert jnp.allclose(out, ref_mirror, atol=2e-3, rtol=2e-3)
    assert jnp.allclose(out, ref_f32, atol=5e-2, rtol=5e-2)

    # NOTE: get_action additionally applies Tanh outside forward(); forward()
    # itself is just the raw MLP logits, reproduced above.
    print("KERNEL_OK")
</pallas_src>

<mosaic_0001>
module attributes {stable_mosaic.version = 11 : i64} {
  func.func @mlp_kernel(%arg0: i32, %arg1: memref<2x128xbf16, #tpu.memory_space<vmem>>, %arg2: memref<128x2xbf16, #tpu.memory_space<vmem>>, %arg3: memref<128x1xbf16, #tpu.memory_space<vmem>>, %arg4: memref<128x128xbf16, #tpu.memory_space<vmem>>, %arg5: memref<128x1xbf16, #tpu.memory_space<vmem>>, %arg6: memref<1x128xbf16, #tpu.memory_space<vmem>>, %arg7: memref<1x128xf32, #tpu.memory_space<vmem>>) attributes {dimension_semantics = [#tpu.dimension_semantics<parallel>], iteration_bounds = array<i64: 1>, scalar_prefetch = 0 : i64, scratch_operands = 0 : i64, tpu.core_type = #tpu.core_type<tc>, window_params = [{transform_indices = @transform_0, window_bounds = array<i64: 2, 128>}, {pipeline_mode = #tpu.pipeline_mode<synchronous>, transform_indices = @transform_1, window_bounds = array<i64: 128, 2>}, {pipeline_mode = #tpu.pipeline_mode<synchronous>, transform_indices = @transform_2, window_bounds = array<i64: 128, 1>}, {pipeline_mode = #tpu.pipeline_mode<synchronous>, transform_indices = @transform_3, window_bounds = array<i64: 128, 128>}, {pipeline_mode = #tpu.pipeline_mode<synchronous>, transform_indices = @transform_4, window_bounds = array<i64: 128, 1>}, {pipeline_mode = #tpu.pipeline_mode<synchronous>, transform_indices = @transform_5, window_bounds = array<i64: 1, 128>}, {transform_indices = @transform_6, window_bounds = array<i64: 1, 128>}]} {
    %c0 = arith.constant 0 : index
    %c0_0 = arith.constant 0 : index
    %0 = vector.load %arg2[%c0, %c0_0] : memref<128x2xbf16, #tpu.memory_space<vmem>>, vector<128x2xbf16>
    %c0_1 = arith.constant 0 : index
    %c0_2 = arith.constant 0 : index
    %1 = vector.load %arg1[%c0_1, %c0_2] : memref<2x128xbf16, #tpu.memory_space<vmem>>, vector<2x128xbf16>
    %cst = arith.constant dense<0.000000e+00> : vector<128x128xf32>
    %2 = tpu.matmul %0, %1, %cst {dimension_numbers = #tpu.dot_dimension_numbers<[1], [0], [0], [1], [0, 0, 1, 1], [], []>} : vector<128x2xbf16>, vector<2x128xbf16>, vector<128x128xf32> -> vector<128x128xf32>
    %3 = arith.truncf %2 : vector<128x128xf32> to vector<128x128xbf16>
    %c0_3 = arith.constant 0 : index
    %c0_4 = arith.constant 0 : index
    %4 = vector.load %arg3[%c0_3, %c0_4] : memref<128x1xbf16, #tpu.memory_space<vmem>>, vector<128x1xbf16>
    %5 = vector.broadcast %4 : vector<128x1xbf16> to vector<128x128xbf16>
    %6 = arith.addf %3, %5 : vector<128x128xbf16>
    %cst_5 = arith.constant 0.000000e+00 : bf16
    %7 = vector.broadcast %cst_5 : bf16 to vector<128x128xbf16>
    %8 = arith.maximumf %6, %7 : vector<128x128xbf16>
    %c0_6 = arith.constant 0 : index
    %c0_7 = arith.constant 0 : index
    %9 = vector.load %arg4[%c0_6, %c0_7] : memref<128x128xbf16, #tpu.memory_space<vmem>>, vector<128x128xbf16>
    %cst_8 = arith.constant dense<0.000000e+00> : vector<128x128xf32>
    %10 = tpu.matmul %9, %8, %cst_8 {dimension_numbers = #tpu.dot_dimension_numbers<[1], [0], [0], [1], [0, 0, 1, 1], [], []>} : vector<128x128xbf16>, vector<128x128xbf16>, vector<128x128xf32> -> vector<128x128xf32>
    %11 = arith.truncf %10 : vector<128x128xf32> to vector<128x128xbf16>
    %c0_9 = arith.constant 0 : index
    %c0_10 = arith.constant 0 : index
    %12 = vector.load %arg5[%c0_9, %c0_10] : memref<128x1xbf16, #tpu.memory_space<vmem>>, vector<128x1xbf16>
    %13 = vector.broadcast %12 : vector<128x1xbf16> to vector<128x128xbf16>
    %14 = arith.addf %11, %13 : vector<128x128xbf16>
    %cst_11 = arith.constant 0.000000e+00 : bf16
    %15 = vector.broadcast %cst_11 : bf16 to vector<128x128xbf16>
    %16 = arith.maximumf %14, %15 : vector<128x128xbf16>
    %c0_12 = arith.constant 0 : index
    %c0_13 = arith.constant 0 : index
    %17 = vector.load %arg6[%c0_12, %c0_13] : memref<1x128xbf16, #tpu.memory_space<vmem>>, vector<1x128xbf16>
    %cst_14 = arith.constant dense<0.000000e+00> : vector<1x128xf32>
    %18 = tpu.matmul %17, %16, %cst_14 {dimension_numbers = #tpu.dot_dimension_numbers<[1], [0], [0], [1], [0, 0, 1, 1], [], []>} : vector<1x128xbf16>, vector<128x128xbf16>, vector<1x128xf32> -> vector<1x128xf32>
    %c0_15 = arith.constant 0 : index
    %c0_16 = arith.constant 0 : index
    %19 = vector.load %arg7[%c0_15, %c0_16] : memref<1x128xf32, #tpu.memory_space<vmem>>, vector<1x128xf32>
    tpu.vector_store %arg7[%c0_15, %c0_16], %18 {strides = array<i32>} : memref<1x128xf32, #tpu.memory_space<vmem>>, vector<1x128xf32>,
    return
  }
  func.func @transform_0(%arg0: i32) -> (i32, i32) {
    %c0_i32 = arith.constant 0 : i32
    %c0_i32_0 = arith.constant 0 : i32
    return %c0_i32, %arg0 : i32, i32
  }
  func.func @transform_1(%arg0: i32) -> (i32, i32) {
    %c0_i32 = arith.constant 0 : i32
    %c0_i32_0 = arith.constant 0 : i32
    %c0_i32_1 = arith.constant 0 : i32
    return %c0_i32, %c0_i32_0 : i32, i32
  }
  func.func @transform_2(%arg0: i32) -> (i32, i32) {
    %c0_i32 = arith.constant 0 : i32
    %c0_i32_0 = arith.constant 0 : i32
    %c0_i32_1 = arith.constant 0 : i32
    return %c0_i32, %c0_i32_0 : i32, i32
  }
  func.func @transform_3(%arg0: i32) -> (i32, i32) {
    %c0_i32 = arith.constant 0 : i32
    %c0_i32_0 = arith.constant 0 : i32
    %c0_i32_1 = arith.constant 0 : i32
    return %c0_i32, %c0_i32_0 : i32, i32
  }
  func.func @transform_4(%arg0: i32) -> (i32, i32) {
    %c0_i32 = arith.constant 0 : i32
    %c0_i32_0 = arith.constant 0 : i32
    %c0_i32_1 = arith.constant 0 : i32
    return %c0_i32, %c0_i32_0 : i32, i32
  }
  func.func @transform_5(%arg0: i32) -> (i32, i32) {
    %c0_i32 = arith.constant 0 : i32
    %c0_i32_0 = arith.constant 0 : i32
    %c0_i32_1 = arith.constant 0 : i32
    return %c0_i32, %c0_i32_0 : i32, i32
  }
  func.func @transform_6(%arg0: i32) -> (i32, i32) {
    %c0_i32 = arith.constant 0 : i32
    %c0_i32_0 = arith.constant 0 : i32
    return %c0_i32, %arg0 : i32, i32
  }
}

</mosaic_0001>

<llo_original>
// kernel: tpu_custom_call.1
$region0: #{tpu_custom_call.1}
  #allocation0 [shape = 'u32[]', space=smem, size = 0x4, offset = 0x4, fixed_abs, tag = 'smem constant byte address 0x4 - core index']
  #allocation1 [shape = 'u32[144,128]{1,0:T(1,128)}', space=vmem, size = 0x12000, scoped, tag = 'internal scratch']
  %s0 = inlined_call_operand.vmem [shape: bf16[2,128], index: 0, kind: input, shape index: {}]
  %s1 = inlined_call_operand.vmem [shape: bf16[128,2], index: 1, kind: input, shape index: {}]
  %s2 = inlined_call_operand.vmem [shape: bf16[128,1], index: 2, kind: input, shape index: {}]
  %s3 = inlined_call_operand.vmem [shape: bf16[128,128], index: 3, kind: input, shape index: {}]
  %s4 = inlined_call_operand.vmem [shape: bf16[128,1], index: 4, kind: input, shape index: {}]
  %s5 = inlined_call_operand.vmem [shape: bf16[1,128], index: 5, kind: input, shape index: {}]
  %s6 = inlined_call_operand.hbm [shape: f32[1,128], index: 6, kind: output, shape index: {}]
  %s7 = sld [smem:[#allocation0]]
  $region34: #{tpu_custom_call.1} parent=0
    _
  %s9 = ssub.s32 1, %s7
  %s10 = scalar_select 0, %s9, %s7
  $region1: #{tpu_custom_call.1} parent=0
    #allocation2 [shape = 'u8[512]{0}', space=vmem, size = 0x400, scoped, tag = 'output window, operand 0, single buffered']
    #allocation3 [shape = 's32[1]{0}', space=sflag, size = 0x4, scoped, tag = 'scoped memory for tpu_custom_call.1']
    %11 = vsyncpa [#allocation3], 0
    // Predicated region
    $region2: #{tpu_custom_call.1} parent=1 // pred_check
      _
    $region3: #{tpu_custom_call.1} parent=1 // pred_check_branch
      %13 = sbr.rel (0) target = $region5
    $region4: #{tpu_custom_call.1} parent=1 // pred_region
      _
    $region5: #{tpu_custom_call.1} parent=1 // pred_fallthru
      _
    // Predicated region
    $region6: #{tpu_custom_call.1} parent=1 // pred_check
      _
    $region7: #{tpu_custom_call.1} parent=1 // pred_check_branch
      %15 = sbr.rel (0) target = $region9
    $region8: #{tpu_custom_call.1} parent=1 // pred_region
      _
    $region9: #{tpu_custom_call.1} parent=1 // pred_fallthru
      _
    // Predicated region
    $region10: #{tpu_custom_call.1} parent=1 // pred_check
      _
    $region11: #{tpu_custom_call.1} parent=1 // pred_check_branch
      %17 = sbr.rel (0) target = $region13
    $region12: #{tpu_custom_call.1} parent=1 // pred_region
      _
    $region13: #{tpu_custom_call.1} parent=1 // pred_fallthru
      _
    // Predicated region
    $region14: #{tpu_custom_call.1} parent=1 // pred_check
      _
    $region15: #{tpu_custom_call.1} parent=1 // pred_check_branch
      %19 = sbr.rel (0) target = $region17
    $region16: #{tpu_custom_call.1} parent=1 // pred_region
      _
    $region17: #{tpu_custom_call.1} parent=1 // pred_fallthru
      _
    // Predicated region
    $region18: #{tpu_custom_call.1} parent=1 // pred_check
      _
    $region19: #{tpu_custom_call.1} parent=1 // pred_check_branch
      %21 = sbr.rel (0) target = $region21
    $region20: #{tpu_custom_call.1} parent=1 // pred_region
      _
    $region21: #{tpu_custom_call.1} parent=1 // pred_fallthru
      _
    // Predicated region
    $region22: #{tpu_custom_call.1} parent=1 // pred_check
      _
    $region23: #{tpu_custom_call.1} parent=1 // pred_check_branch
      %23 = sbr.rel (0) target = $region25
    $region24: #{tpu_custom_call.1} parent=1 // pred_region
      _
    $region25: #{tpu_custom_call.1} parent=1 // pred_fallthru
      _
    %v25 = vld [vmem:[%s1] sm:$0xf]
    %v26 = vld [vmem:[%s1 + $0x4] sm:$0xf]
    %v27 = vld [vmem:[%s1 + $0x8] sm:$0xf]
    %v28 = vld [vmem:[%s1 + $0xc] sm:$0xf]
    %v29 = vld [vmem:[%s1 + $0x10] sm:$0xf]
    %v30 = vld [vmem:[%s1 + $0x14] sm:$0xf]
    %v31 = vld [vmem:[%s1 + $0x18] sm:$0xf]
    %v32 = vld [vmem:[%s1 + $0x1c] sm:$0xf]
    %v33 = vld [vmem:[%s1 + $0x20] sm:$0xf]
    %v34 = vld [vmem:[%s1 + $0x24] sm:$0xf]
    %v35 = vld [vmem:[%s1 + $0x28] sm:$0xf]
    %v36 = vld [vmem:[%s1 + $0x2c] sm:$0xf]
    %v37 = vld [vmem:[%s1 + $0x30] sm:$0xf]
    %v38 = vld [vmem:[%s1 + $0x34] sm:$0xf]
    %v39 = vld [vmem:[%s1 + $0x38] sm:$0xf]
    %v40 = vld [vmem:[%s1 + $0x3c] sm:$0xf]
    %v41 = vld [vmem:[%s0] sm:$0x1]
    %v58 = vunpack.c.l.b16 %v25
    %v59 = vunpack.c.l.b16 %v26
    %v60 = vunpack.c.l.b16 %v27
    %v61 = vunpack.c.l.b16 %v28
    %v62 = vunpack.c.l.b16 %v29
    %v63 = vunpack.c.l.b16 %v30
    %v64 = vunpack.c.l.b16 %v31
    %v65 = vunpack.c.l.b16 %v32
    %v66 = vunpack.c.l.b16 %v33
    %v67 = vunpack.c.l.b16 %v34
    %v68 = vunpack.c.l.b16 %v35
    %v69 = vunpack.c.l.b16 %v36
    %v70 = vunpack.c.l.b16 %v37
    %v71 = vunpack.c.l.b16 %v38
    %v72 = vunpack.c.l.b16 %v39
    %v73 = vunpack.c.l.b16 %v40
    %v74 = vpack.c.b16 %v59, %v58
    %v75 = vpack.c.b16 %v61, %v60
    %v76 = vpack.c.b16 %v63, %v62
    %v77 = vpack.c.b16 %v65, %v64
    %v78 = vpack.c.b16 %v67, %v66
    %v79 = vpack.c.b16 %v69, %v68
    %v80 = vpack.c.b16 %v71, %v70
    %v81 = vpack.c.b16 %v73, %v72
    %vm82 = vcmask 15360
    %v84 = vsel %vm82, %v74, 0
    %v87 = vsel %vm82, %v75, 0
    %v90 = vsel %vm82, %v76, 0
    %v93 = vsel %vm82, %v77, 0
    %v96 = vsel %vm82, %v78, 0
    %v99 = vsel %vm82, %v79, 0
    %v102 = vsel %vm82, %v80, 0
    %v105 = vsel %vm82, %v81, 0
    %vm107 = vcmask 1040384
    %v109 = vsel %vm107, %v41, 0
    %111 = vmatprep.subr.bf16.mxu0 0
    %112 = vmatpush1.bf16.msra.mxu0 %v109
    %113 = vmatprep.subr.bf16.mxu0 0
    %114 = vmatpush1.bf16.msra.mxu0 0
    %115 = vmatprep.subr.bf16.mxu0 0
    %116 = vmatpush1.bf16.msra.mxu0 0
    %117 = vmatprep.subr.bf16.mxu0 0
    %118 = vmatpush1.bf16.msra.mxu0 0
    %119 = vmatprep.subr.bf16.mxu0 0
    %120 = vmatpush1.bf16.msra.mxu0 0
    %121 = vmatprep.subr.bf16.mxu0 0
    %122 = vmatpush1.bf16.msra.mxu0 0
    %123 = vmatprep.subr.bf16.mxu0 0
    %124 = vmatpush1.bf16.msra.mxu0 0
    %125 = vmatprep.subr.bf16.mxu0 0
    %126 = vmatpush1.bf16.msra.mxu0 0
    %127 = vmatprep.subr.bf16.mxu0 0
    %128 = vmatpush1.bf16.msra.mxu0 0
    %129 = vmatprep.subr.bf16.mxu0 0
    %130 = vmatpush1.bf16.msra.mxu0 0
    %131 = vmatprep.subr.bf16.mxu0 0
    %132 = vmatpush1.bf16.msra.mxu0 0
    %133 = vmatprep.subr.bf16.mxu0 0
    %134 = vmatpush1.bf16.msra.mxu0 0
    %135 = vmatprep.subr.bf16.mxu0 0
    %136 = vmatpush1.bf16.msra.mxu0 0
    %137 = vmatprep.subr.bf16.mxu0 0
    %138 = vmatpush1.bf16.msra.mxu0 0
    %139 = vmatprep.subr.bf16.mxu0 0
    %140 = vmatpush1.bf16.msra.mxu0 0
    %141 = vmatprep.subr.bf16.mxu0 0
    %142 = vmatpush1.bf16.msra.mxu0 0
    %143 = vmatprep.mubr.bf16.mxu0 0
    %144 = vmatmul.mubr.bf16.gmra.mrb[0].mxu0 %v84
    %v145 = vpop.f32.mrb[0].mxu0
    %v146 = vadd.f32 0.0, %v145
    %v147 = vpop.f32.mrb[0].mxu0
    %v148 = vpop.f32.mrb[0].mxu0
    %v149 = vadd.f32 0.0, %v148
    %v150 = vpop.f32.mrb[0].mxu0
    %151 = vmatprep.mubr.bf16.mxu0 0
    %152 = vmatmul.mubr.bf16.gmra.mrb[0].mxu0 %v87
    %v153 = vpop.f32.mrb[0].mxu0
    %v154 = vadd.f32 0.0, %v153
    %v155 = vpop.f32.mrb[0].mxu0
    %v156 = vpop.f32.mrb[0].mxu0
    %v157 = vadd.f32 0.0, %v156
    %v158 = vpop.f32.mrb[0].mxu0
    %159 = vmatprep.mubr.bf16.mxu0 0
    %160 = vmatmul.mubr.bf16.gmra.mrb[0].mxu0 %v90
    %v161 = vpop.f32.mrb[0].mxu0
    %v162 = vadd.f32 0.0, %v161
    %v163 = vpop.f32.mrb[0].mxu0
    %v164 = vpop.f32.mrb[0].mxu0
    %v165 = vadd.f32 0.0, %v164
    %v166 = vpop.f32.mrb[0].mxu0
    %167 = vmatprep.mubr.bf16.mxu0 0
    %168 = vmatmul.mubr.bf16.gmra.mrb[0].mxu0 %v93
    %v169 = vpop.f32.mrb[0].mxu0
    %v170 = vadd.f32 0.0, %v169
    %v171 = vpop.f32.mrb[0].mxu0
    %v172 = vpop.f32.mrb[0].mxu0
    %v173 = vadd.f32 0.0, %v172
    %v174 = vpop.f32.mrb[0].mxu0
    %175 = vmatprep.mubr.bf16.mxu0 0
    %176 = vmatmul.mubr.bf16.gmra.mrb[0].mxu0 %v96
    %v177 = vpop.f32.mrb[0].mxu0
    %v178 = vadd.f32 0.0, %v177
    %v179 = vpop.f32.mrb[0].mxu0
    %v180 = vpop.f32.mrb[0].mxu0
    %v181 = vadd.f32 0.0, %v180
    %v182 = vpop.f32.mrb[0].mxu0
    %183 = vmatprep.mubr.bf16.mxu0 0
    %184 = vmatmul.mubr.bf16.gmra.mrb[0].mxu0 %v99
    %v185 = vpop.f32.mrb[0].mxu0
    %v186 = vadd.f32 0.0, %v185
    %v187 = vpop.f32.mrb[0].mxu0
    %v188 = vpop.f32.mrb[0].mxu0
    %v189 = vadd.f32 0.0, %v188
    %v190 = vpop.f32.mrb[0].mxu0
    %191 = vmatprep.mubr.bf16.mxu0 0
    %192 = vmatmul.mubr.bf16.gmra.mrb[0].mxu0 %v102
    %v193 = vpop.f32.mrb[0].mxu0
    %v194 = vadd.f32 0.0, %v193
    %v195 = vpop.f32.mrb[0].mxu0
    %v196 = vpop.f32.mrb[0].mxu0
    %v197 = vadd.f32 0.0, %v196
    %v198 = vpop.f32.mrb[0].mxu0
    %199 = vmatprep.mubr.bf16.mxu0 0
    %200 = vmatmul.mubr.bf16.gmra.mrb[0].mxu0 %v105
    %v201 = vpop.f32.mrb[0].mxu0
    %v202 = vadd.f32 0.0, %v201
    %v203 = vpop.f32.mrb[0].mxu0
    %v204 = vpop.f32.mrb[0].mxu0
    %v205 = vadd.f32 0.0, %v204
    %v206 = vpop.f32.mrb[0].mxu0
    %207 = vdwg.mxu0
    %v208 = vpack.c.bf16 %v149, %v146
    %v209 = vpack.c.bf16 %v157, %v154
    %v210 = vpack.c.bf16 %v165, %v162
    %v211 = vpack.c.bf16 %v173, %v170
    %v212 = vpack.c.bf16 %v181, %v178
    %v213 = vpack.c.bf16 %v189, %v186
    %v214 = vpack.c.bf16 %v197, %v194
    %v215 = vpack.c.bf16 %v205, %v202
    %v216 = vld [vmem:[%s2] sm:$0xf]
    %v217 = vld [vmem:[%s2 + $0x4] sm:$0xf]
    %v218 = vld [vmem:[%s2 + $0x8] sm:$0xf]
    %v219 = vld [vmem:[%s2 + $0xc] sm:$0xf]
    %v220 = vld [vmem:[%s2 + $0x10] sm:$0xf]
    %v221 = vld [vmem:[%s2 + $0x14] sm:$0xf]
    %v222 = vld [vmem:[%s2 + $0x18] sm:$0xf]
    %v223 = vld [vmem:[%s2 + $0x1c] sm:$0xf]
    %v224 = vld [vmem:[%s2 + $0x20] sm:$0xf]
    %v225 = vld [vmem:[%s2 + $0x24] sm:$0xf]
    %v226 = vld [vmem:[%s2 + $0x28] sm:$0xf]
    %v227 = vld [vmem:[%s2 + $0x2c] sm:$0xf]
    %v228 = vld [vmem:[%s2 + $0x30] sm:$0xf]
    %v229 = vld [vmem:[%s2 + $0x34] sm:$0xf]
    %v230 = vld [vmem:[%s2 + $0x38] sm:$0xf]
    %v231 = vld [vmem:[%s2 + $0x3c] sm:$0xf]
    %233 = vset.pattern.permute.xlu0 0
    %234 = vperm.xlu0 %233, %v216
    %v235 = vpop.permute.xlu0 %234
    %v238 = vunpack.c.l.s4 839922192
    %v239 = vunpack.c.0.s8 %v238
    %v240 = vlaneseq
    %v241 = vshrl.u32 %v240, 7
    %v242 = vsub.s32 %v239, %v241
    %v243 = vrot.slane %v235, %v242
    %245 = vset.pattern.permute.xlu0 0
    %246 = vperm.xlu0 %245, %v217
    %v247 = vpop.permute.xlu0 %246
    %v250 = vunpack.c.l.s4 839922192
    %v251 = vunpack.c.0.s8 %v250
    %v252 = vlaneseq
    %v253 = vshrl.u32 %v252, 7
    %v254 = vsub.s32 %v251, %v253
    %v255 = vrot.slane %v247, %v254
    %257 = vset.pattern.permute.xlu0 0
    %258 = vperm.xlu0 %257, %v218
    %v259 = vpop.permute.xlu0 %258
    %v262 = vunpack.c.l.s4 839922192
    %v263 = vunpack.c.0.s8 %v262
    %v264 = vlaneseq
    %v265 = vshrl.u32 %v264, 7
    %v266 = vsub.s32 %v263, %v265
    %v267 = vrot.slane %v259, %v266
    %269 = vset.pattern.permute.xlu0 0
    %270 = vperm.xlu0 %269, %v219
    %v271 = vpop.permute.xlu0 %270
    %v274 = vunpack.c.l.s4 839922192
    %v275 = vunpack.c.0.s8 %v274
    %v276 = vlaneseq
    %v277 = vshrl.u32 %v276, 7
    %v278 = vsub.s32 %v275, %v277
    %v279 = vrot.slane %v271, %v278
    %281 = vset.pattern.permute.xlu0 0
    %282 = vperm.xlu0 %281, %v220
    %v283 = vpop.permute.xlu0 %282
    %v286 = vunpack.c.l.s4 839922192
    %v287 = vunpack.c.0.s8 %v286
    %v288 = vlaneseq
    %v289 = vshrl.u32 %v288, 7
    %v290 = vsub.s32 %v287, %v289
    %v291 = vrot.slane %v283, %v290
    %293 = vset.pattern.permute.xlu0 0
    %294 = vperm.xlu0 %293, %v221
    %v295 = vpop.permute.xlu0 %294
    %v298 = vunpack.c.l.s4 839922192
    %v299 = vunpack.c.0.s8 %v298
    %v300 = vlaneseq
    %v301 = vshrl.u32 %v300, 7
    %v302 = vsub.s32 %v299, %v301
    %v303 = vrot.slane %v295, %v302
    %305 = vset.pattern.permute.xlu0 0
    %306 = vperm.xlu0 %305, %v222
    %v307 = vpop.permute.xlu0 %306
    %v310 = vunpack.c.l.s4 839922192
    %v311 = vunpack.c.0.s8 %v310
    %v312 = vlaneseq
    %v313 = vshrl.u32 %v312, 7
    %v314 = vsub.s32 %v311, %v313
    %v315 = vrot.slane %v307, %v314
    %317 = vset.pattern.permute.xlu0 0
    %318 = vperm.xlu0 %317, %v223
    %v319 = vpop.permute.xlu0 %318
    %v322 = vunpack.c.l.s4 839922192
    %v323 = vunpack.c.0.s8 %v322
    %v324 = vlaneseq
    %v325 = vshrl.u32 %v324, 7
    %v326 = vsub.s32 %v323, %v325
    %v327 = vrot.slane %v319, %v326
    %329 = vset.pattern.permute.xlu0 0
    %330 = vperm.xlu0 %329, %v224
    %v331 = vpop.permute.xlu0 %330
    %v334 = vunpack.c.l.s4 839922192
    %v335 = vunpack.c.0.s8 %v334
    %v336 = vlaneseq
    %v337 = vshrl.u32 %v336, 7
    %v338 = vsub.s32 %v335, %v337
    %v339 = vrot.slane %v331, %v338
    %341 = vset.pattern.permute.xlu0 0
    %342 = vperm.xlu0 %341, %v225
    %v343 = vpop.permute.xlu0 %342
    %v346 = vunpack.c.l.s4 839922192
    %v347 = vunpack.c.0.s8 %v346
    %v348 = vlaneseq
    %v349 = vshrl.u32 %v348, 7
    %v350 = vsub.s32 %v347, %v349
    %v351 = vrot.slane %v343, %v350
    %353 = vset.pattern.permute.xlu0 0
    %354 = vperm.xlu0 %353, %v226
    %v355 = vpop.permute.xlu0 %354
    %v358 = vunpack.c.l.s4 839922192
    %v359 = vunpack.c.0.s8 %v358
    %v360 = vlaneseq
    %v361 = vshrl.u32 %v360, 7
    %v362 = vsub.s32 %v359, %v361
    %v363 = vrot.slane %v355, %v362
    %365 = vset.pattern.permute.xlu0 0
    %366 = vperm.xlu0 %365, %v227
    %v367 = vpop.permute.xlu0 %366
    %v370 = vunpack.c.l.s4 839922192
    %v371 = vunpack.c.0.s8 %v370
    %v372 = vlaneseq
    %v373 = vshrl.u32 %v372, 7
    %v374 = vsub.s32 %v371, %v373
    %v375 = vrot.slane %v367, %v374
    %377 = vset.pattern.permute.xlu0 0
    %378 = vperm.xlu0 %377, %v228
    %v379 = vpop.permute.xlu0 %378
    %v382 = vunpack.c.l.s4 839922192
    %v383 = vunpack.c.0.s8 %v382
    %v384 = vlaneseq
    %v385 = vshrl.u32 %v384, 7
    %v386 = vsub.s32 %v383, %v385
    %v387 = vrot.slane %v379, %v386
    %389 = vset.pattern.permute.xlu0 0
    %390 = vperm.xlu0 %389, %v229
    %v391 = vpop.permute.xlu0 %390
    %v394 = vunpack.c.l.s4 839922192
    %v395 = vunpack.c.0.s8 %v394
    %v396 = vlaneseq
    %v397 = vshrl.u32 %v396, 7
    %v398 = vsub.s32 %v395, %v397
    %v399 = vrot.slane %v391, %v398
    %401 = vset.pattern.permute.xlu0 0
    %402 = vperm.xlu0 %401, %v230
    %v403 = vpop.permute.xlu0 %402
    %v406 = vunpack.c.l.s4 839922192
    %v407 = vunpack.c.0.s8 %v406
    %v408 = vlaneseq
    %v409 = vshrl.u32 %v408, 7
    %v410 = vsub.s32 %v407, %v409
    %v411 = vrot.slane %v403, %v410
    %413 = vset.pattern.permute.xlu0 0
    %414 = vperm.xlu0 %413, %v231
    %v415 = vpop.permute.xlu0 %414
    %v418 = vunpack.c.l.s4 839922192
    %v419 = vunpack.c.0.s8 %v418
    %v420 = vlaneseq
    %v421 = vshrl.u32 %v420, 7
    %v422 = vsub.s32 %v419, %v421
    %v423 = vrot.slane %v415, %v422
    %v440 = vunpack.c.l.b16 %v243
    %v441 = vunpack.c.l.b16 %v255
    %v442 = vunpack.c.l.b16 %v267
    %v443 = vunpack.c.l.b16 %v279
    %v444 = vunpack.c.l.b16 %v291
    %v445 = vunpack.c.l.b16 %v303
    %v446 = vunpack.c.l.b16 %v315
    %v447 = vunpack.c.l.b16 %v327
    %v448 = vunpack.c.l.b16 %v339
    %v449 = vunpack.c.l.b16 %v351
    %v450 = vunpack.c.l.b16 %v363
    %v451 = vunpack.c.l.b16 %v375
    %v452 = vunpack.c.l.b16 %v387
    %v453 = vunpack.c.l.b16 %v399
    %v454 = vunpack.c.l.b16 %v411
    %v455 = vunpack.c.l.b16 %v423
    %v456 = vpack.c.b16 %v441, %v440
    %v457 = vpack.c.b16 %v443, %v442
    %v458 = vpack.c.b16 %v445, %v444
    %v459 = vpack.c.b16 %v447, %v446
    %v460 = vpack.c.b16 %v449, %v448
    %v461 = vpack.c.b16 %v451, %v450
    %v462 = vpack.c.b16 %v453, %v452
    %v463 = vpack.c.b16 %v455, %v454
    %v472 = vadd.bf16 %v208, %v456
    %v473 = vadd.bf16 %v209, %v457
    %v474 = vadd.bf16 %v210, %v458
    %v475 = vadd.bf16 %v211, %v459
    %v476 = vadd.bf16 %v212, %v460
    %v477 = vadd.bf16 %v213, %v461
    %v478 = vadd.bf16 %v214, %v462
    %v479 = vadd.bf16 %v215, %v463
    %v480 = vmax.bf16 %v472, 0
    %v481 = vmax.bf16 %v473, 0
    %v482 = vmax.bf16 %v474, 0
    %v483 = vmax.bf16 %v475, 0
    %v484 = vmax.bf16 %v476, 0
    %v485 = vmax.bf16 %v477, 0
    %v486 = vmax.bf16 %v478, 0
    %v487 = vmax.bf16 %v479, 0
    %v488 = vld [vmem:[%s3] sm:$0xf]
    %v489 = vld [vmem:[%s3 + $0x4] sm:$0xf]
    %v490 = vld [vmem:[%s3 + $0x8] sm:$0xf]
    %v491 = vld [vmem:[%s3 + $0xc] sm:$0xf]
    %v492 = vld [vmem:[%s3 + $0x10] sm:$0xf]
    %v493 = vld [vmem:[%s3 + $0x14] sm:$0xf]
    %v494 = vld [vmem:[%s3 + $0x18] sm:$0xf]
    %v495 = vld [vmem:[%s3 + $0x1c] sm:$0xf]
    %v496 = vld [vmem:[%s3 + $0x20] sm:$0xf]
    %v497 = vld [vmem:[%s3 + $0x24] sm:$0xf]
    %v498 = vld [vmem:[%s3 + $0x28] sm:$0xf]
    %v499 = vld [vmem:[%s3 + $0x2c] sm:$0xf]
    %v500 = vld [vmem:[%s3 + $0x30] sm:$0xf]
    %v501 = vld [vmem:[%s3 + $0x34] sm:$0xf]
    %v502 = vld [vmem:[%s3 + $0x38] sm:$0xf]
    %v503 = vld [vmem:[%s3 + $0x3c] sm:$0xf]
    %v520 = vunpack.c.l.b16 %v488
    %v521 = vunpack.c.l.b16 %v489
    %v522 = vunpack.c.l.b16 %v490
    %v523 = vunpack.c.l.b16 %v491
    %v524 = vunpack.c.l.b16 %v492
    %v525 = vunpack.c.l.b16 %v493
    %v526 = vunpack.c.l.b16 %v494
    %v527 = vunpack.c.l.b16 %v495
    %v528 = vunpack.c.l.b16 %v496
    %v529 = vunpack.c.l.b16 %v497
    %v530 = vunpack.c.l.b16 %v498
    %v531 = vunpack.c.l.b16 %v499
    %v532 = vunpack.c.l.b16 %v500
    %v533 = vunpack.c.l.b16 %v501
    %v534 = vunpack.c.l.b16 %v502
    %v535 = vunpack.c.l.b16 %v503
    %v536 = vpack.c.b16 %v521, %v520
    %v537 = vpack.c.b16 %v523, %v522
    %v538 = vpack.c.b16 %v525, %v524
    %v539 = vpack.c.b16 %v527, %v526
    %v540 = vpack.c.b16 %v529, %v528
    %v541 = vpack.c.b16 %v531, %v530
    %v542 = vpack.c.b16 %v533, %v532
    %v543 = vpack.c.b16 %v535, %v534
    %552 = vmatprep.subr.bf16.mxu0 0
    %553 = vmatpush1.bf16.msra.mxu0 %v480
    %554 = vmatprep.subr.bf16.mxu0 0
    %555 = vmatpush1.bf16.msra.mxu0 %v481
    %556 = vmatprep.subr.bf16.mxu0 0
    %557 = vmatpush1.bf16.msra.mxu0 %v482
    %558 = vmatprep.subr.bf16.mxu0 0
    %559 = vmatpush1.bf16.msra.mxu0 %v483
    %560 = vmatprep.subr.bf16.mxu0 0
    %561 = vmatpush1.bf16.msra.mxu0 %v484
    %562 = vmatprep.subr.bf16.mxu0 0
    %563 = vmatpush1.bf16.msra.mxu0 %v485
    %564 = vmatprep.subr.bf16.mxu0 0
    %565 = vmatpush1.bf16.msra.mxu0 %v486
    %566 = vmatprep.subr.bf16.mxu0 0
    %567 = vmatpush1.bf16.msra.mxu0 %v487
    %568 = vmatprep.subr.bf16.mxu0 0
    %569 = vmatpush1.bf16.msra.mxu0 0
    %570 = vmatprep.subr.bf16.mxu0 0
    %571 = vmatpush1.bf16.msra.mxu0 0
    %572 = vmatprep.subr.bf16.mxu0 0
    %573 = vmatpush1.bf16.msra.mxu0 0
    %574 = vmatprep.subr.bf16.mxu0 0
    %575 = vmatpush1.bf16.msra.mxu0 0
    %576 = vmatprep.subr.bf16.mxu0 0
    %577 = vmatpush1.bf16.msra.mxu0 0
    %578 = vmatprep.subr.bf16.mxu0 0
    %579 = vmatpush1.bf16.msra.mxu0 0
    %580 = vmatprep.subr.bf16.mxu0 0
    %581 = vmatpush1.bf16.msra.mxu0 0
    %582 = vmatprep.subr.bf16.mxu0 0
    %583 = vmatpush1.bf16.msra.mxu0 0
    %584 = vmatprep.mubr.bf16.mxu0 0
    %585 = vmatmul.mubr.bf16.gmra.mrb[0].mxu0 %v536
    %v586 = vpop.f32.mrb[0].mxu0
    %v587 = vadd.f32 0.0, %v586
    %v588 = vpop.f32.mrb[0].mxu0
    %v589 = vpop.f32.mrb[0].mxu0
    %v590 = vadd.f32 0.0, %v589
    %v591 = vpop.f32.mrb[0].mxu0
    %592 = vmatprep.mubr.bf16.mxu0 0
    %593 = vmatmul.mubr.bf16.gmra.mrb[0].mxu0 %v537
    %v594 = vpop.f32.mrb[0].mxu0
    %v595 = vadd.f32 0.0, %v594
    %v596 = vpop.f32.mrb[0].mxu0
    %v597 = vpop.f32.mrb[0].mxu0
    %v598 = vadd.f32 0.0, %v597
    %v599 = vpop.f32.mrb[0].mxu0
    %600 = vmatprep.mubr.bf16.mxu0 0
    %601 = vmatmul.mubr.bf16.gmra.mrb[0].mxu0 %v538
    %v602 = vpop.f32.mrb[0].mxu0
    %v603 = vadd.f32 0.0, %v602
    %v604 = vpop.f32.mrb[0].mxu0
    %v605 = vpop.f32.mrb[0].mxu0
    %v606 = vadd.f32 0.0, %v605
    %v607 = vpop.f32.mrb[0].mxu0
    %608 = vmatprep.mubr.bf16.mxu0 0
    %609 = vmatmul.mubr.bf16.gmra.mrb[0].mxu0 %v539
    %v610 = vpop.f32.mrb[0].mxu0
    %v611 = vadd.f32 0.0, %v610
    %v612 = vpop.f32.mrb[0].mxu0
    %v613 = vpop.f32.mrb[0].mxu0
    %v614 = vadd.f32 0.0, %v613
    %v615 = vpop.f32.mrb[0].mxu0
    %616 = vmatprep.mubr.bf16.mxu0 0
    %617 = vmatmul.mubr.bf16.gmra.mrb[0].mxu0 %v540
    %v618 = vpop.f32.mrb[0].mxu0
    %v619 = vadd.f32 0.0, %v618
    %v620 = vpop.f32.mrb[0].mxu0
    %v621 = vpop.f32.mrb[0].mxu0
    %v622 = vadd.f32 0.0, %v621
    %v623 = vpop.f32.mrb[0].mxu0
    %624 = vmatprep.mubr.bf16.mxu0 0
    %625 = vmatmul.mubr.bf16.gmra.mrb[0].mxu0 %v541
    %v626 = vpop.f32.mrb[0].mxu0
    %v627 = vadd.f32 0.0, %v626
    %v628 = vpop.f32.mrb[0].mxu0
    %v629 = vpop.f32.mrb[0].mxu0
    %v630 = vadd.f32 0.0, %v629
    %v631 = vpop.f32.mrb[0].mxu0
    %632 = vmatprep.mubr.bf16.mxu0 0
    %633 = vmatmul.mubr.bf16.gmra.mrb[0].mxu0 %v542
    %v634 = vpop.f32.mrb[0].mxu0
    %v635 = vadd.f32 0.0, %v634
    %v636 = vpop.f32.mrb[0].mxu0
    %v637 = vpop.f32.mrb[0].mxu0
    %v638 = vadd.f32 0.0, %v637
    %v639 = vpop.f32.mrb[0].mxu0
    %640 = vmatprep.mubr.bf16.mxu0 0
    %641 = vmatmul.mubr.bf16.gmra.mrb[0].mxu0 %v543
    %v642 = vpop.f32.mrb[0].mxu0
    %v643 = vadd.f32 0.0, %v642
    %v644 = vpop.f32.mrb[0].mxu0
    %v645 = vpop.f32.mrb[0].mxu0
    %v646 = vadd.f32 0.0, %v645
    %v647 = vpop.f32.mrb[0].mxu0
    %648 = vdwg.mxu0
    %v649 = vpack.c.bf16 %v590, %v587
    %v650 = vpack.c.bf16 %v598, %v595
    %v651 = vpack.c.bf16 %v606, %v603
    %v652 = vpack.c.bf16 %v614, %v611
    %v653 = vpack.c.bf16 %v622, %v619
    %v654 = vpack.c.bf16 %v630, %v627
    %v655 = vpack.c.bf16 %v638, %v635
    %v656 = vpack.c.bf16 %v646, %v643
    %v657 = vld [vmem:[%s4] sm:$0xf]
    %v658 = vld [vmem:[%s4 + $0x4] sm:$0xf]
    %v659 = vld [vmem:[%s4 + $0x8] sm:$0xf]
    %v660 = vld [vmem:[%s4 + $0xc] sm:$0xf]
    %v661 = vld [vmem:[%s4 + $0x10] sm:$0xf]
    %v662 = vld [vmem:[%s4 + $0x14] sm:$0xf]
    %v663 = vld [vmem:[%s4 + $0x18] sm:$0xf]
    %v664 = vld [vmem:[%s4 + $0x1c] sm:$0xf]
    %v665 = vld [vmem:[%s4 + $0x20] sm:$0xf]
    %v666 = vld [vmem:[%s4 + $0x24] sm:$0xf]
    %v667 = vld [vmem:[%s4 + $0x28] sm:$0xf]
    %v668 = vld [vmem:[%s4 + $0x2c] sm:$0xf]
    %v669 = vld [vmem:[%s4 + $0x30] sm:$0xf]
    %v670 = vld [vmem:[%s4 + $0x34] sm:$0xf]
    %v671 = vld [vmem:[%s4 + $0x38] sm:$0xf]
    %v672 = vld [vmem:[%s4 + $0x3c] sm:$0xf]
    %674 = vset.pattern.permute.xlu0 0
    %675 = vperm.xlu0 %674, %v657
    %v676 = vpop.permute.xlu0 %675
    %v679 = vunpack.c.l.s4 839922192
    %v680 = vunpack.c.0.s8 %v679
    %v681 = vlaneseq
    %v682 = vshrl.u32 %v681, 7
    %v683 = vsub.s32 %v680, %v682
    %v684 = vrot.slane %v676, %v683
    %686 = vset.pattern.permute.xlu0 0
    %687 = vperm.xlu0 %686, %v658
    %v688 = vpop.permute.xlu0 %687
    %v691 = vunpack.c.l.s4 839922192
    %v692 = vunpack.c.0.s8 %v691
    %v693 = vlaneseq
    %v694 = vshrl.u32 %v693, 7
    %v695 = vsub.s32 %v692, %v694
    %v696 = vrot.slane %v688, %v695
    %698 = vset.pattern.permute.xlu0 0
    %699 = vperm.xlu0 %698, %v659
    %v700 = vpop.permute.xlu0 %699
    %v703 = vunpack.c.l.s4 839922192
    %v704 = vunpack.c.0.s8 %v703
    %v705 = vlaneseq
    %v706 = vshrl.u32 %v705, 7
    %v707 = vsub.s32 %v704, %v706
    %v708 = vrot.slane %v700, %v707
    %710 = vset.pattern.permute.xlu0 0
    %711 = vperm.xlu0 %710, %v660
    %v712 = vpop.permute.xlu0 %711
    %v715 = vunpack.c.l.s4 839922192
    %v716 = vunpack.c.0.s8 %v715
    %v717 = vlaneseq
    %v718 = vshrl.u32 %v717, 7
    %v719 = vsub.s32 %v716, %v718
    %v720 = vrot.slane %v712, %v719
    %722 = vset.pattern.permute.xlu0 0
    %723 = vperm.xlu0 %722, %v661
    %v724 = vpop.permute.xlu0 %723
    %v727 = vunpack.c.l.s4 839922192
    %v728 = vunpack.c.0.s8 %v727
    %v729 = vlaneseq
    %v730 = vshrl.u32 %v729, 7
    %v731 = vsub.s32 %v728, %v730
    %v732 = vrot.slane %v724, %v731
    %734 = vset.pattern.permute.xlu0 0
    %735 = vperm.xlu0 %734, %v662
    %v736 = vpop.permute.xlu0 %735
    %v739 = vunpack.c.l.s4 839922192
    %v740 = vunpack.c.0.s8 %v739
    %v741 = vlaneseq
    %v742 = vshrl.u32 %v741, 7
    %v743 = vsub.s32 %v740, %v742
    %v744 = vrot.slane %v736, %v743
    %746 = vset.pattern.permute.xlu0 0
    %747 = vperm.xlu0 %746, %v663
    %v748 = vpop.permute.xlu0 %747
    %v751 = vunpack.c.l.s4 839922192
    %v752 = vunpack.c.0.s8 %v751
    %v753 = vlaneseq
    %v754 = vshrl.u32 %v753, 7
    %v755 = vsub.s32 %v752, %v754
    %v756 = vrot.slane %v748, %v755
    %758 = vset.pattern.permute.xlu0 0
    %759 = vperm.xlu0 %758, %v664
    %v760 = vpop.permute.xlu0 %759
    %v763 = vunpack.c.l.s4 839922192
    %v764 = vunpack.c.0.s8 %v763
    %v765 = vlaneseq
    %v766 = vshrl.u32 %v765, 7
    %v767 = vsub.s32 %v764, %v766
    %v768 = vrot.slane %v760, %v767
    %770 = vset.pattern.permute.xlu0 0
    %771 = vperm.xlu0 %770, %v665
    %v772 = vpop.permute.xlu0 %771
    %v775 = vunpack.c.l.s4 839922192
    %v776 = vunpack.c.0.s8 %v775
    %v777 = vlaneseq
    %v778 = vshrl.u32 %v777, 7
    %v779 = vsub.s32 %v776, %v778
    %v780 = vrot.slane %v772, %v779
    %782 = vset.pattern.permute.xlu0 0
    %783 = vperm.xlu0 %782, %v666
    %v784 = vpop.permute.xlu0 %783
    %v787 = vunpack.c.l.s4 839922192
    %v788 = vunpack.c.0.s8 %v787
    %v789 = vlaneseq
    %v790 = vshrl.u32 %v789, 7
    %v791 = vsub.s32 %v788, %v790
    %v792 = vrot.slane %v784, %v791
    %794 = vset.pattern.permute.xlu0 0
    %795 = vperm.xlu0 %794, %v667
    %v796 = vpop.permute.xlu0 %795
    %v799 = vunpack.c.l.s4 839922192
    %v800 = vunpack.c.0.s8 %v799
    %v801 = vlaneseq
    %v802 = vshrl.u32 %v801, 7
    %v803 = vsub.s32 %v800, %v802
    %v804 = vrot.slane %v796, %v803
    %806 = vset.pattern.permute.xlu0 0
    %807 = vperm.xlu0 %806, %v668
    %v808 = vpop.permute.xlu0 %807
    %v811 = vunpack.c.l.s4 839922192
    %v812 = vunpack.c.0.s8 %v811
    %v813 = vlaneseq
    %v814 = vshrl.u32 %v813, 7
    %v815 = vsub.s32 %v812, %v814
    %v816 = vrot.slane %v808, %v815
    %818 = vset.pattern.permute.xlu0 0
    %819 = vperm.xlu0 %818, %v669
    %v820 = vpop.permute.xlu0 %819
    %v823 = vunpack.c.l.s4 839922192
    %v824 = vunpack.c.0.s8 %v823
    %v825 = vlaneseq
    %v826 = vshrl.u32 %v825, 7
    %v827 = vsub.s32 %v824, %v826
    %v828 = vrot.slane %v820, %v827
    %830 = vset.pattern.permute.xlu0 0
    %831 = vperm.xlu0 %830, %v670
    %v832 = vpop.permute.xlu0 %831
    %v835 = vunpack.c.l.s4 839922192
    %v836 = vunpack.c.0.s8 %v835
    %v837 = vlaneseq
    %v838 = vshrl.u32 %v837, 7
    %v839 = vsub.s32 %v836, %v838
    %v840 = vrot.slane %v832, %v839
    %842 = vset.pattern.permute.xlu0 0
    %843 = vperm.xlu0 %842, %v671
    %v844 = vpop.permute.xlu0 %843
    %v847 = vunpack.c.l.s4 839922192
    %v848 = vunpack.c.0.s8 %v847
    %v849 = vlaneseq
    %v850 = vshrl.u32 %v849, 7
    %v851 = vsub.s32 %v848, %v850
    %v852 = vrot.slane %v844, %v851
    %854 = vset.pattern.permute.xlu0 0
    %855 = vperm.xlu0 %854, %v672
    %v856 = vpop.permute.xlu0 %855
    %v859 = vunpack.c.l.s4 839922192
    %v860 = vunpack.c.0.s8 %v859
    %v861 = vlaneseq
    %v862 = vshrl.u32 %v861, 7
    %v863 = vsub.s32 %v860, %v862
    %v864 = vrot.slane %v856, %v863
    %v881 = vunpack.c.l.b16 %v684
    %v882 = vunpack.c.l.b16 %v696
    %v883 = vunpack.c.l.b16 %v708
    %v884 = vunpack.c.l.b16 %v720
    %v885 = vunpack.c.l.b16 %v732
    %v886 = vunpack.c.l.b16 %v744
    %v887 = vunpack.c.l.b16 %v756
    %v888 = vunpack.c.l.b16 %v768
    %v889 = vunpack.c.l.b16 %v780
    %v890 = vunpack.c.l.b16 %v792
    %v891 = vunpack.c.l.b16 %v804
    %v892 = vunpack.c.l.b16 %v816
    %v893 = vunpack.c.l.b16 %v828
    %v894 = vunpack.c.l.b16 %v840
    %v895 = vunpack.c.l.b16 %v852
    %v896 = vunpack.c.l.b16 %v864
    %v897 = vpack.c.b16 %v882, %v881
    %v898 = vpack.c.b16 %v884, %v883
    %v899 = vpack.c.b16 %v886, %v885
    %v900 = vpack.c.b16 %v888, %v887
    %v901 = vpack.c.b16 %v890, %v889
    %v902 = vpack.c.b16 %v892, %v891
    %v903 = vpack.c.b16 %v894, %v893
    %v904 = vpack.c.b16 %v896, %v895
    %v913 = vadd.bf16 %v649, %v897
    %v914 = vadd.bf16 %v650, %v898
    %v915 = vadd.bf16 %v651, %v899
    %v916 = vadd.bf16 %v652, %v900
    %v917 = vadd.bf16 %v653, %v901
    %v918 = vadd.bf16 %v654, %v902
    %v919 = vadd.bf16 %v655, %v903
    %v920 = vadd.bf16 %v656, %v904
    %v921 = vmax.bf16 %v913, 0
    %v922 = vmax.bf16 %v914, 0
    %v923 = vmax.bf16 %v915, 0
    %v924 = vmax.bf16 %v916, 0
    %v925 = vmax.bf16 %v917, 0
    %v926 = vmax.bf16 %v918, 0
    %v927 = vmax.bf16 %v919, 0
    %v928 = vmax.bf16 %v920, 0
    %v929 = vld [vmem:[%s5] sm:$0x1]
    %930 = vmatprep.subr.bf16.mxu0 0
    %931 = vmatpush1.bf16.msra.mxu0 %v921
    %932 = vmatprep.subr.bf16.mxu0 0
    %933 = vmatpush1.bf16.msra.mxu0 %v922
    %934 = vmatprep.subr.bf16.mxu0 0
    %935 = vmatpush1.bf16.msra.mxu0 %v923
    %936 = vmatprep.subr.bf16.mxu0 0
    %937 = vmatpush1.bf16.msra.mxu0 %v924
    %938 = vmatprep.subr.bf16.mxu0 0
    %939 = vmatpush1.bf16.msra.mxu0 %v925
    %940 = vmatprep.subr.bf16.mxu0 0
    %941 = vmatpush1.bf16.msra.mxu0 %v926
    %942 = vmatprep.subr.bf16.mxu0 0
    %943 = vmatpush1.bf16.msra.mxu0 %v927
    %944 = vmatprep.subr.bf16.mxu0 0
    %945 = vmatpush1.bf16.msra.mxu0 %v928
    %946 = vmatprep.subr.bf16.mxu0 0
    %947 = vmatpush1.bf16.msra.mxu0 0
    %948 = vmatprep.subr.bf16.mxu0 0
    %949 = vmatpush1.bf16.msra.mxu0 0
    %950 = vmatprep.subr.bf16.mxu0 0
    %951 = vmatpush1.bf16.msra.mxu0 0
    %952 = vmatprep.subr.bf16.mxu0 0
    %953 = vmatpush1.bf16.msra.mxu0 0
    %954 = vmatprep.subr.bf16.mxu0 0
    %955 = vmatpush1.bf16.msra.mxu0 0
    %956 = vmatprep.subr.bf16.mxu0 0
    %957 = vmatpush1.bf16.msra.mxu0 0
    %958 = vmatprep.subr.bf16.mxu0 0
    %959 = vmatpush1.bf16.msra.mxu0 0
    %960 = vmatprep.subr.bf16.mxu0 0
    %961 = vmatpush1.bf16.msra.mxu0 0
    %962 = vmatprep.mubr.bf16.mxu0 0
    %963 = vmatmul.mubr.bf16.gmra.mrb[0].mxu0 %v929
    %v964 = vpop.f32.mrb[0].mxu0
    %v965 = vadd.f32 0.0, %v964
    %v966 = vpop.f32.mrb[0].mxu0
    %v967 = vpop.f32.mrb[0].mxu0
    %v968 = vpop.f32.mrb[0].mxu0
    %969 = vdwg.mxu0
    %970 = vst [vmem:[#allocation2] sm:$0x1] %v965
    // Predicated region
    $region26: #{tpu_custom_call.1} parent=1 // pred_check
      _
    $region27: #{tpu_custom_call.1} parent=1 // pred_check_branch
      %972 = sbr.rel (0) target = $region29
    $region28: #{tpu_custom_call.1} parent=1 // pred_region
      %s974 = ssub.s32 16, 16
      %975 = vsyncadd [#allocation3], %s974
      %s977 = sshll.u32 [#allocation2], 4
      %s978 = int_to_ptr.vmem [resolvable:$true] %s977
      %980 = dma.vmem_to_hbm [thread:$0]  %s978, 16, %s6, [#allocation3]
    $region29: #{tpu_custom_call.1} parent=1 // pred_fallthru
      _
    // Predicated region
    $region30: #{tpu_custom_call.1} parent=1 // pred_check
      _
    $region31: #{tpu_custom_call.1} parent=1 // pred_check_branch
      %982 = sbr.rel (0) target = $region33
    $region32: #{tpu_custom_call.1} parent=1 // pred_region
      %983 = dma.done [#allocation3], 16
    $region33: #{tpu_custom_call.1} parent=1 // pred_fallthru
      _
    %984 = vsyncpa [#allocation3], 1

</llo_original>
